<compile_context>
chip_gen: v7x
topology: tpu7x:2x2x1
jax: 0.10.0
libtpu: 0.0.40
codegen_flags: <defaults>
</compile_context>

<pallas_src>
import functools

import jax
import jax.numpy as jnp
from jax.experimental import pallas as pl
from jax.experimental.pallas import tpu as pltpu

_LANE = 128
_SUBLANE = 8


def _round_up(v, m):
    return ((v + m - 1) // m) * m


def _ln_kernel(x_ref, w_ref, b_ref, o_ref, *, eps, inv_hidden):
    x = x_ref[...].astype(jnp.float32)
    # One-pass stats: padded lanes are zero so sums are unaffected; divide by true hidden.
    s = jnp.sum(x, axis=-1, keepdims=True)
    s2 = jnp.sum(x * x, axis=-1, keepdims=True)
    mean = s * inv_hidden
    var = jnp.maximum(s2 * inv_hidden - mean * mean, 0.0)
    inv = jax.lax.rsqrt(var + eps)
    o_ref[...] = ((x - mean) * inv * w_ref[...] + b_ref[...]).astype(o_ref.dtype)


def _ln_residual_kernel(x_ref, r_ref, w_ref, b_ref, o_ref, ro_ref, *, eps, inv_hidden):
    x = x_ref[...].astype(jnp.float32) + r_ref[...].astype(jnp.float32)
    ro_ref[...] = x.astype(ro_ref.dtype)
    s = jnp.sum(x, axis=-1, keepdims=True)
    s2 = jnp.sum(x * x, axis=-1, keepdims=True)
    mean = s * inv_hidden
    var = jnp.maximum(s2 * inv_hidden - mean * mean, 0.0)
    inv = jax.lax.rsqrt(var + eps)
    o_ref[...] = ((x - mean) * inv * w_ref[...] + b_ref[...]).astype(o_ref.dtype)


def _pick_block_rows(rows, hidden_pad, stream_itemsizes):
    """~4 MiB per tile, <=~48 MiB resident (all row streams, double-buffered) so it
    also fits v7x's 64 MiB/TC VMEM; sublane (8) aligned; never larger than the data."""
    max_item = max(stream_itemsizes)
    br = (4 << 20) // (hidden_pad * max_item)
    per_row_resident = 2 * hidden_pad * sum(stream_itemsizes)  # x2 for double buffering
    br = min(br, (48 << 20) // per_row_resident)
    br = min(br, 1024)
    br = max(_SUBLANE, (br // _SUBLANE) * _SUBLANE)
    br = min(br, _round_up(rows, _SUBLANE))
    return br


def _vmem_limit(block_rows, hidden_pad, stream_itemsizes):
    resident = 2 * block_rows * hidden_pad * sum(stream_itemsizes)  # double-buffered tiles
    resident += 4 * hidden_pad * 4                                  # f32 weight + bias
    return int(max(resident + (4 << 20), 32 << 20))


def _pad2d(a, rows_pad, cols_pad):
    r, c = a.shape
    if r == rows_pad and c == cols_pad:
        return a
    return jnp.pad(a, ((0, rows_pad - r), (0, cols_pad - c)))


def layer_norm(x, weight, bias=None, residual=None, *, eps=1e-6, block_rows=None):
    """LayerNorm over the last dim with optional fused residual add.

    x: [..., hidden]; weight/bias: [hidden] (bias may be None); residual: like x or None.
    Returns normed, or (normed, new_residual) if residual is given.
    """
    orig_shape = x.shape
    hidden = orig_shape[-1]
    x2 = x.reshape(-1, hidden)
    rows = x2.shape[0]

    hidden_pad = max(_LANE, _round_up(hidden, _LANE))
    inv_hidden = 1.0 / float(hidden)

    # Lane-dense (1, hidden_pad) f32 params; cast hoisted out of the kernel body.
    w2 = _pad2d(weight.reshape(1, hidden).astype(jnp.float32), 1, hidden_pad)
    if bias is None:
        b2 = jnp.zeros((1, hidden_pad), jnp.float32)
    else:
        b2 = _pad2d(bias.reshape(1, hidden).astype(jnp.float32), 1, hidden_pad)

    if residual is None:
        stream_itemsizes = (x.dtype.itemsize, x.dtype.itemsize)                  # x, out
    else:
        stream_itemsizes = (x.dtype.itemsize, residual.dtype.itemsize,
                            x.dtype.itemsize, residual.dtype.itemsize)           # x, res, out, res_out

    if block_rows is None:
        block_rows = _pick_block_rows(rows, hidden_pad, stream_itemsizes)
    block_rows = max(_SUBLANE, (block_rows // _SUBLANE) * _SUBLANE)

    rows_pad = _round_up(rows, block_rows)
    grid = (rows_pad // block_rows,)

    x2 = _pad2d(x2, rows_pad, hidden_pad)

    row_spec = pl.BlockSpec((block_rows, hidden_pad), lambda i: (i, 0))
    vec_spec = pl.BlockSpec((1, hidden_pad), lambda i: (0, 0))
    cparams = pltpu.CompilerParams(
        dimension_semantics=("parallel",),
        vmem_limit_bytes=_vmem_limit(block_rows, hidden_pad, stream_itemsizes),
    )

    if residual is None:
        out = pl.pallas_call(
            functools.partial(_ln_kernel, eps=eps, inv_hidden=inv_hidden),
            out_shape=jax.ShapeDtypeStruct((rows_pad, hidden_pad), x.dtype),
            grid=grid,
            in_specs=[row_spec, vec_spec, vec_spec],
            out_specs=row_spec,
            compiler_params=cparams,
        )(x2, w2, b2)
        return out[:rows, :hidden].reshape(orig_shape)

    res2 = _pad2d(residual.reshape(-1, hidden), rows_pad, hidden_pad)
    # x tile is fully consumed and new_residual has identical shape/dtype when dtypes
    # match: alias to drop one HBM allocation at the XLA level.
    aliases = {0: 1} if x.dtype == residual.dtype else {}
    out, res_out = pl.pallas_call(
        functools.partial(_ln_residual_kernel, eps=eps, inv_hidden=inv_hidden),
        out_shape=(jax.ShapeDtypeStruct((rows_pad, hidden_pad), x.dtype),
                   jax.ShapeDtypeStruct((rows_pad, hidden_pad), residual.dtype)),
        grid=grid,
        in_specs=[row_spec, row_spec, vec_spec, vec_spec],
        out_specs=(row_spec, row_spec),
        input_output_aliases=aliases,
        compiler_params=cparams,
    )(x2, res2, w2, b2)
    return (out[:rows, :hidden].reshape(orig_shape),
            res_out[:rows, :hidden].reshape(orig_shape))


if __name__ == "__main__":
    eps = 1e-6

    def ref_ln(xf, w, b):
        xf = xf.astype(jnp.float32)
        m = xf.mean(-1, keepdims=True)
        v = ((xf - m) ** 2).mean(-1, keepdims=True)
        return (xf - m) * jax.lax.rsqrt(v + eps) * w.astype(jnp.float32) + b.astype(jnp.float32)

    # --- Test 1: lane-dense hidden, bf16, both paths (demo shapes) ---
    batch, seq, hidden = 2, 8, 128
    dtype = jnp.bfloat16  # torch default would be float16; bf16 is TPU-native
    kx, kr = jax.random.split(jax.random.PRNGKey(0))
    x = jax.random.normal(kx, (batch, seq, hidden), dtype=jnp.float32).astype(dtype)
    residual = jax.random.normal(kr, (batch, seq, hidden), dtype=jnp.float32).astype(dtype)
    weight = jnp.ones((hidden,), dtype=dtype)  # LayerNorm.create_weight init: ones
    bias = jnp.ones((hidden,), dtype=dtype)

    y = jax.block_until_ready(layer_norm(x, weight, bias, eps=eps))
    y2, new_res = layer_norm(x, weight, bias, residual, eps=eps)
    y2 = jax.block_until_ready(y2)
    new_res = jax.block_until_ready(new_res)

    ref1 = ref_ln(x, weight, bias)
    xr = x.astype(jnp.float32) + residual.astype(jnp.float32)
    ref2 = ref_ln(xr, weight, bias)
    assert jnp.allclose(y.astype(jnp.float32), ref1, atol=2e-2, rtol=2e-2)
    assert jnp.allclose(y2.astype(jnp.float32), ref2, atol=2e-2, rtol=2e-2)
    assert jnp.allclose(new_res.astype(jnp.float32), xr, atol=2e-2, rtol=2e-2)

    # --- Test 2: non-lane-dense hidden + non-divisible rows, f32, nontrivial params ---
    rows2, hidden2 = 10, 96
    k1, k2, k3, k4 = jax.random.split(jax.random.PRNGKey(1), 4)
    xb = jax.random.normal(k1, (rows2, hidden2), dtype=jnp.float32)
    rb = jax.random.normal(k2, (rows2, hidden2), dtype=jnp.float32)
    wb = 1.0 + 0.1 * jax.random.normal(k3, (hidden2,), dtype=jnp.float32)
    bb = 0.1 * jax.random.normal(k4, (hidden2,), dtype=jnp.float32)

    yb, rob = layer_norm(xb, wb, bb, rb, eps=eps)
    yb = jax.block_until_ready(yb)
    rob = jax.block_until_ready(rob)
    xrb = xb + rb
    refb = ref_ln(xrb, wb, bb)
    assert jnp.allclose(yb, refb, atol=1e-4, rtol=1e-4)
    assert jnp.allclose(rob, xrb, atol=1e-6, rtol=1e-6)

    print("KERNEL_OK")
</pallas_src>

<mosaic_0001>
module attributes {stable_mosaic.version = 11 : i64} {
  func.func @_ln_kernel(%arg0: i32, %arg1: memref<16x128xbf16, #tpu.memory_space<vmem>>, %arg2: memref<1x128xf32, #tpu.memory_space<vmem>>, %arg3: memref<1x128xf32, #tpu.memory_space<vmem>>, %arg4: memref<16x128xbf16, #tpu.memory_space<vmem>>) attributes {dimension_semantics = [#tpu.dimension_semantics<parallel>], iteration_bounds = array<i64: 1>, scalar_prefetch = 0 : i64, scratch_operands = 0 : i64, tpu.core_type = #tpu.core_type<tc>, window_params = [{transform_indices = @transform_0, window_bounds = array<i64: 16, 128>}, {pipeline_mode = #tpu.pipeline_mode<synchronous>, transform_indices = @transform_1, window_bounds = array<i64: 1, 128>}, {pipeline_mode = #tpu.pipeline_mode<synchronous>, transform_indices = @transform_2, window_bounds = array<i64: 1, 128>}, {transform_indices = @transform_3, window_bounds = array<i64: 16, 128>}]} {
    %c0 = arith.constant 0 : index
    %c0_0 = arith.constant 0 : index
    %0 = vector.load %arg1[%c0, %c0_0] : memref<16x128xbf16, #tpu.memory_space<vmem>>, vector<16x128xbf16>
    %1 = arith.extf %0 : vector<16x128xbf16> to vector<16x128xf32>
    %cst = arith.constant dense<0.000000e+00> : vector<16xf32>
    %2 = vector.multi_reduction <add>, %1, %cst [1] : vector<16x128xf32> to vector<16xf32>
    %3 = vector.shape_cast %2 : vector<16xf32> to vector<16x1xf32>
    %4 = arith.mulf %1, %1 : vector<16x128xf32>
    %cst_1 = arith.constant dense<0.000000e+00> : vector<16xf32>
    %5 = vector.multi_reduction <add>, %4, %cst_1 [1] : vector<16x128xf32> to vector<16xf32>
    %6 = vector.shape_cast %5 : vector<16xf32> to vector<16x1xf32>
    %cst_2 = arith.constant 7.812500e-03 : f32
    %7 = vector.broadcast %cst_2 : f32 to vector<16x1xf32>
    %8 = arith.mulf %3, %7 : vector<16x1xf32>
    %cst_3 = arith.constant 7.812500e-03 : f32
    %9 = vector.broadcast %cst_3 : f32 to vector<16x1xf32>
    %10 = arith.mulf %6, %9 : vector<16x1xf32>
    %11 = arith.mulf %8, %8 : vector<16x1xf32>
    %12 = arith.subf %10, %11 : vector<16x1xf32>
    %cst_4 = arith.constant 0.000000e+00 : f32
    %13 = vector.broadcast %cst_4 : f32 to vector<16x1xf32>
    %14 = arith.maximumf %12, %13 : vector<16x1xf32>
    %cst_5 = arith.constant 9.99999997E-7 : f32
    %15 = vector.broadcast %cst_5 : f32 to vector<16x1xf32>
    %16 = arith.addf %14, %15 : vector<16x1xf32>
    %17 = math.rsqrt %16 : vector<16x1xf32>
    %18 = vector.broadcast %8 : vector<16x1xf32> to vector<16x128xf32>
    %19 = arith.subf %1, %18 : vector<16x128xf32>
    %20 = vector.broadcast %17 : vector<16x1xf32> to vector<16x128xf32>
    %21 = arith.mulf %19, %20 : vector<16x128xf32>
    %c0_6 = arith.constant 0 : index
    %c0_7 = arith.constant 0 : index
    %22 = vector.load %arg2[%c0_6, %c0_7] : memref<1x128xf32, #tpu.memory_space<vmem>>, vector<1x128xf32>
    %23 = vector.broadcast %22 : vector<1x128xf32> to vector<16x128xf32>
    %24 = arith.mulf %21, %23 : vector<16x128xf32>
    %c0_8 = arith.constant 0 : index
    %c0_9 = arith.constant 0 : index
    %25 = vector.load %arg3[%c0_8, %c0_9] : memref<1x128xf32, #tpu.memory_space<vmem>>, vector<1x128xf32>
    %26 = vector.broadcast %25 : vector<1x128xf32> to vector<16x128xf32>
    %27 = arith.addf %24, %26 : vector<16x128xf32>
    %28 = arith.truncf %27 : vector<16x128xf32> to vector<16x128xbf16>
    %c0_10 = arith.constant 0 : index
    %c0_11 = arith.constant 0 : index
    %29 = vector.load %arg4[%c0_10, %c0_11] : memref<16x128xbf16, #tpu.memory_space<vmem>>, vector<16x128xbf16>
    tpu.vector_store %arg4[%c0_10, %c0_11], %28 {strides = array<i32>} : memref<16x128xbf16, #tpu.memory_space<vmem>>, vector<16x128xbf16>,
    return
  }
  func.func @transform_0(%arg0: i32) -> (i32, i32) {
    %c0_i32 = arith.constant 0 : i32
    %c0_i32_0 = arith.constant 0 : i32
    return %arg0, %c0_i32 : i32, i32
  }
  func.func @transform_1(%arg0: i32) -> (i32, i32) {
    %c0_i32 = arith.constant 0 : i32
    %c0_i32_0 = arith.constant 0 : i32
    %c0_i32_1 = arith.constant 0 : i32
    return %c0_i32, %c0_i32_0 : i32, i32
  }
  func.func @transform_2(%arg0: i32) -> (i32, i32) {
    %c0_i32 = arith.constant 0 : i32
    %c0_i32_0 = arith.constant 0 : i32
    %c0_i32_1 = arith.constant 0 : i32
    return %c0_i32, %c0_i32_0 : i32, i32
  }
  func.func @transform_3(%arg0: i32) -> (i32, i32) {
    %c0_i32 = arith.constant 0 : i32
    %c0_i32_0 = arith.constant 0 : i32
    return %arg0, %c0_i32 : i32, i32
  }
}

</mosaic_0001>

<llo_original>
// kernel: tpu_custom_call.1
$region0: #{tpu_custom_call.1}
  #allocation0 [shape = 'u32[]', space=smem, size = 0x4, offset = 0x4, fixed_abs, tag = 'smem constant byte address 0x4 - core index']
  #allocation1 [shape = 'u32[144,128]{1,0:T(1,128)}', space=vmem, size = 0x12000, scoped, tag = 'internal scratch']
  %s0 = inlined_call_operand.hbm [shape: bf16[16,128], index: 0, kind: input, shape index: {}]
  %s1 = inlined_call_operand.vmem [shape: f32[1,128], index: 1, kind: input, shape index: {}]
  %s2 = inlined_call_operand.vmem [shape: f32[1,128], index: 2, kind: input, shape index: {}]
  %s3 = inlined_call_operand.hbm [shape: bf16[16,128], index: 3, kind: output, shape index: {}]
  %s4 = sld [smem:[#allocation0]]
  $region26: #{tpu_custom_call.1} parent=0
    _
  %s6 = ssub.s32 1, %s4
  %s7 = scalar_select 0, %s6, %s4
  $region1: #{tpu_custom_call.1} parent=0
    #allocation2 [shape = 'u8[4096]{0}', space=vmem, size = 0x1000, scoped, tag = 'input window, operand 0, single buffered']
    #allocation3 [shape = 's32[1]{0}', space=sflag, size = 0x4, scoped, tag = 'scoped memory for tpu_custom_call.1']
    #allocation4 [shape = 's32[1]{0}', space=sflag, size = 0x4, scoped, tag = 'scoped memory for tpu_custom_call.1']
    #allocation5 [shape = 'u8[4096]{0}', space=vmem, size = 0x1000, scoped, tag = 'output window, operand 0, single buffered']
    %8 = vsyncpa [#allocation3], 0
    %9 = vsyncpa [#allocation4], 0
    // Predicated region
    $region2: #{tpu_custom_call.1} parent=1 // pred_check
      _
    $region3: #{tpu_custom_call.1} parent=1 // pred_check_branch
      %11 = sbr.rel (0) target = $region5
    $region4: #{tpu_custom_call.1} parent=1 // pred_region
      %s13 = ssub.s32 128, 128
      %14 = vsyncadd [#allocation3], %s13
      %s15 = sshll.u32 [#allocation2], 4
      %s16 = int_to_ptr.vmem [resolvable:$true] %s15
      %21 = dma.hbm_to_vmem [thread:$0]  %s0, 128, %s16, [#allocation3], 64, 64, 4
    $region5: #{tpu_custom_call.1} parent=1 // pred_fallthru
      _
    // Predicated region
    $region6: #{tpu_custom_call.1} parent=1 // pred_check
      _
    $region7: #{tpu_custom_call.1} parent=1 // pred_check_branch
      %23 = sbr.rel (0) target = $region9
    $region8: #{tpu_custom_call.1} parent=1 // pred_region
      _
    $region9: #{tpu_custom_call.1} parent=1 // pred_fallthru
      _
    // Predicated region
    $region10: #{tpu_custom_call.1} parent=1 // pred_check
      _
    $region11: #{tpu_custom_call.1} parent=1 // pred_check_branch
      %25 = sbr.rel (0) target = $region13
    $region12: #{tpu_custom_call.1} parent=1 // pred_region
      _
    $region13: #{tpu_custom_call.1} parent=1 // pred_fallthru
      _
    // Predicated region
    $region14: #{tpu_custom_call.1} parent=1 // pred_check
      _
    $region15: #{tpu_custom_call.1} parent=1 // pred_check_branch
      %27 = sbr.rel (0) target = $region17
    $region16: #{tpu_custom_call.1} parent=1 // pred_region
      %28 = dma.done [#allocation3], 128
    $region17: #{tpu_custom_call.1} parent=1 // pred_fallthru
      _
    %v29 = vld [vmem:[#allocation2] sm:$0xf]
    %v30 = vld [vmem:[#allocation2 + $0x4] sm:$0xf]
    %v31 = vunpack.c.l.bf16 %v29
    %v32 = vunpack.c.l.bf16 %v30
    %33 = vadd.xlane.f32.xlu0 %v31
    %v34 = vpop.xlane.xlu0 %33
    %35 = vadd.xlane.f32.xlu0 %v32
    %v36 = vpop.xlane.xlu0 %35
    %v37 = vmul.f32 %v31, %v31
    %v38 = vmul.f32 %v32, %v32
    %39 = vadd.xlane.f32.xlu0 %v37
    %v40 = vpop.xlane.xlu0 %39
    %41 = vadd.xlane.f32.xlu0 %v38
    %v42 = vpop.xlane.xlu0 %41
    %v43 = vmul.f32 %v34, 0.0078125
    %v44 = vmul.f32 %v36, 0.0078125
    %v45 = vmul.f32 %v40, 0.0078125
    %v46 = vmul.f32 %v42, 0.0078125
    %v47 = vmul.f32 %v43, %v43
    %v48 = vmul.f32 %v44, %v44
    %v49 = vsub.f32 %v45, %v47
    %v50 = vsub.f32 %v46, %v48
    %v51 = vmax.f32 %v49, 0.0
    %v52 = vmax.f32 %v50, 0.0
    %v53 = vadd.f32 %v51, 1e-06
    %v54 = vadd.f32 %v52, 1e-06
    %v55 = vrsqrt.pop %v53
    %v56 = vrsqrt.pop %v54
    %v57 = vsub.f32 %v31, %v43
    %v58 = vsub.f32 %v32, %v44
    %v59 = vmul.f32 %v57, %v55
    %v60 = vmul.f32 %v58, %v56
    %v61 = vld [vmem:[%s1] sm:$0x1]
    %v63 = vlaneseq
    %v64 = vshrl.u32 %v63, 7
    %v65 = vsub.s32 0, %v64
    %v66 = vrot.slane %v61, %v65
    %v68 = vmul.f32 %v59, %v66
    %v69 = vmul.f32 %v60, %v66
    %v70 = vld [vmem:[%s2] sm:$0x1]
    %v72 = vlaneseq
    %v73 = vshrl.u32 %v72, 7
    %v74 = vsub.s32 0, %v73
    %v75 = vrot.slane %v70, %v74
    %v77 = vadd.f32 %v68, %v75
    %v78 = vadd.f32 %v69, %v75
    %v79 = vpack.c.bf16 %v78, %v77
    %v81 = vunpack.c.l.b16 %v79
    %v82 = vunpack.c.h.b16 %v79
    %v83 = vpack.c.b16 %v81, %v81
    %v84 = vpack.c.b16 %v82, %v82
    %87 = vst [vmem:[#allocation5] sm:$0xf] %v83
    %88 = vst [vmem:[#allocation5 + $0x4] sm:$0xf] %v84
    // Predicated region
    $region18: #{tpu_custom_call.1} parent=1 // pred_check
      _
    $region19: #{tpu_custom_call.1} parent=1 // pred_check_branch
      %90 = sbr.rel (0) target = $region21
    $region20: #{tpu_custom_call.1} parent=1 // pred_region
      %s92 = ssub.s32 128, 128
      %93 = vsyncadd [#allocation4], %s92
      %s94 = sshll.u32 [#allocation5], 4
      %s95 = int_to_ptr.vmem [resolvable:$true] %s94
      %100 = dma.vmem_to_hbm [thread:$0]  %s95, 128, %s3, [#allocation4], 64, 64, 4
    $region21: #{tpu_custom_call.1} parent=1 // pred_fallthru
      _
    // Predicated region
    $region22: #{tpu_custom_call.1} parent=1 // pred_check
      _
    $region23: #{tpu_custom_call.1} parent=1 // pred_check_branch
      %102 = sbr.rel (0) target = $region25
    $region24: #{tpu_custom_call.1} parent=1 // pred_region
      %103 = dma.done [#allocation4], 128
    $region25: #{tpu_custom_call.1} parent=1 // pred_fallthru
      _
    %104 = vsyncpa [#allocation3], 1
    %105 = vsyncpa [#allocation4], 1

</llo_original>
